<compile_context>
chip_gen: v5e
topology: v5e:2x2
jax: 0.10.0
libtpu: 0.0.40
codegen_flags: <defaults>
</compile_context>

<pallas_src>
import jax
import jax.numpy as jnp
from jax.experimental import pallas as pl
from jax.experimental.pallas import tpu as pltpu

IN_FEATURES = 28 * 28       # 784
HIDDEN = 64
NUM_CLASSES = 10
CLASS_PAD = 128             # lane-dense output width
NEG_INF = -1e30             # bias for pad classes -> exp() == 0


def _round_up(n, m):
    return ((n + m - 1) // m) * m


def _mlp_kernel(x_ref,
                w1_ref, b1_ref,
                w2_ref, b2_ref,
                w3_ref, b3_ref,
                w4_ref, b4_ref,
                o_ref):
    # x tile: (TB, 784) f32, cast to bf16 in-kernel (free: VPU/MXU have slack).
    # Weights bf16, biases f32; every dot accumulates in f32 and all epilogue
    # math (bias add, ReLU, log_softmax) stays in f32.
    x = x_ref[...].astype(jnp.bfloat16)

    h = jnp.dot(x, w1_ref[...], preferred_element_type=jnp.float32) + b1_ref[...]
    h = jnp.maximum(h, 0.0)                                        # (TB, 64) f32

    h = jnp.dot(h.astype(jnp.bfloat16), w2_ref[...],
                preferred_element_type=jnp.float32) + b2_ref[...]
    h = jnp.maximum(h, 0.0)                                        # (TB, 64)

    h = jnp.dot(h.astype(jnp.bfloat16), w3_ref[...],
                preferred_element_type=jnp.float32) + b3_ref[...]
    h = jnp.maximum(h, 0.0)                                        # (TB, 64)

    logits = jnp.dot(h.astype(jnp.bfloat16), w4_ref[...],
                     preferred_element_type=jnp.float32) + b4_ref[...]
    # (TB, 128): lanes 0..9 are real classes, lanes 10..127 carry a -1e30 bias
    # so they contribute exp(.) == 0 to the softmax denominator.

    # log_softmax along the class (lane) axis, all f32; cast to bf16 on store.
    m = jnp.max(logits, axis=-1, keepdims=True)
    shifted = logits - m
    lse = jnp.log(jnp.sum(jnp.exp(shifted), axis=-1, keepdims=True))
    o_ref[...] = (shifted - lse).astype(o_ref.dtype)


def init_params(key):
    """Deterministic init mimicking nn.Linear's U(-1/sqrt(fan_in), 1/sqrt(fan_in)).

    Stored as (in, out) f32 so forward is y = x @ W + b (== PyTorch x @ W.T + b).
    """
    dims = [(IN_FEATURES, HIDDEN), (HIDDEN, HIDDEN), (HIDDEN, HIDDEN),
            (HIDDEN, NUM_CLASSES)]
    params = {}
    keys = jax.random.split(key, 2 * len(dims))
    for i, (fan_in, fan_out) in enumerate(dims):
        bound = 1.0 / (fan_in ** 0.5)
        params[f"w{i+1}"] = jax.random.uniform(
            keys[2 * i], (fan_in, fan_out), jnp.float32, -bound, bound)
        params[f"b{i+1}"] = jax.random.uniform(
            keys[2 * i + 1], (1, fan_out), jnp.float32, -bound, bound)
    return params


def prepare_params(params):
    """Cast/pad (in, out) f32 params into the kernel layout (bf16 W, f32 b)."""
    w1 = params["w1"].astype(jnp.bfloat16)                       # (784, 64)
    w2 = params["w2"].astype(jnp.bfloat16)                       # (64, 64)
    w3 = params["w3"].astype(jnp.bfloat16)                       # (64, 64)
    w4 = jnp.zeros((HIDDEN, CLASS_PAD), jnp.bfloat16)            # (64, 128)
    w4 = w4.at[:, :NUM_CLASSES].set(params["w4"].astype(jnp.bfloat16))

    b1 = params["b1"].reshape(1, HIDDEN).astype(jnp.float32)
    b2 = params["b2"].reshape(1, HIDDEN).astype(jnp.float32)
    b3 = params["b3"].reshape(1, HIDDEN).astype(jnp.float32)
    b4 = jnp.full((1, CLASS_PAD), NEG_INF, jnp.float32)
    b4 = b4.at[0, :NUM_CLASSES].set(params["b4"].reshape(-1).astype(jnp.float32))

    return dict(w1=w1, b1=b1, w2=w2, b2=b2, w3=w3, b3=b3, w4=w4, b4=b4)


def net_forward(x, kparams, *, tb=2048):
    """x: (B, 784) float32.  kparams: output of prepare_params.

    Returns (B, 10) bf16 log-probabilities.
    """
    B = x.shape[0]

    # Adapt the tile to the actual batch: don't stream padded rows for small B,
    # and keep n_tiles >= 2 for large B so v7x's two TensorCores both get work.
    tb_eff = max(8, min(tb, _round_up(pl.cdiv(B, 2), 8)))
    n_tiles = pl.cdiv(B, tb_eff)
    b_pad = n_tiles * tb_eff

    # Only pad the batch remainder (no cast, no K padding): the common case
    # (B a multiple of tb_eff) streams x straight from the caller's buffer.
    x_in = x if b_pad == B else jnp.pad(x, ((0, b_pad - B), (0, 0)))

    w1, b1 = kparams["w1"], kparams["b1"]
    w2, b2 = kparams["w2"], kparams["b2"]
    w3, b3 = kparams["w3"], kparams["b3"]
    w4, b4 = kparams["w4"], kparams["b4"]

    const = lambda i: (0, 0)     # weights/biases: same block every grid step

    flops = 2 * b_pad * (IN_FEATURES * HIDDEN + 2 * HIDDEN * HIDDEN
                         + HIDDEN * CLASS_PAD)
    bytes_accessed = (b_pad * IN_FEATURES * 4                      # x (f32)
                      + (w1.size + w2.size + w3.size + w4.size) * 2  # bf16 weights
                      + (b1.size + b2.size + b3.size + b4.size) * 4  # f32 biases
                      + b_pad * CLASS_PAD * 2)                     # bf16 output
    cost = pl.CostEstimate(flops=flops,
                           transcendentals=b_pad * (CLASS_PAD + 1),
                           bytes_accessed=bytes_accessed)

    out = pl.pallas_call(
        _mlp_kernel,
        out_shape=jax.ShapeDtypeStruct((b_pad, CLASS_PAD), jnp.bfloat16),
        grid_spec=pltpu.PrefetchScalarGridSpec(
            num_scalar_prefetch=0,
            grid=(n_tiles,),
            in_specs=[
                pl.BlockSpec((tb_eff, IN_FEATURES), lambda i: (i, 0)),  # x tile (f32)
                pl.BlockSpec((IN_FEATURES, HIDDEN), const),             # w1
                pl.BlockSpec((1, HIDDEN), const),                       # b1
                pl.BlockSpec((HIDDEN, HIDDEN), const),                  # w2
                pl.BlockSpec((1, HIDDEN), const),                       # b2
                pl.BlockSpec((HIDDEN, HIDDEN), const),                  # w3
                pl.BlockSpec((1, HIDDEN), const),                       # b3
                pl.BlockSpec((HIDDEN, CLASS_PAD), const),               # w4
                pl.BlockSpec((1, CLASS_PAD), const),                    # b4
            ],
            out_specs=pl.BlockSpec((tb_eff, CLASS_PAD), lambda i: (i, 0)),
        ),
        compiler_params=pltpu.CompilerParams(
            dimension_semantics=("parallel",),          # megacore split on v7x
            vmem_limit_bytes=32 * 1024 * 1024,          # fits tb=2048 on v5e too
        ),
        cost_estimate=cost,
    )(x_in, w1, b1, w2, b2, w3, b3, w4, b4)

    # Drop batch padding and pad classes.
    return out[:B, :NUM_CLASSES]


def _reference_forward(x, kparams):
    """Pure-JAX reference using the same bf16 params, f32 math."""
    xf = x.astype(jnp.bfloat16).astype(jnp.float32)
    h = jax.nn.relu(xf @ kparams["w1"].astype(jnp.float32) + kparams["b1"])
    h = jax.nn.relu(h.astype(jnp.bfloat16).astype(jnp.float32)
                    @ kparams["w2"].astype(jnp.float32) + kparams["b2"])
    h = jax.nn.relu(h.astype(jnp.bfloat16).astype(jnp.float32)
                    @ kparams["w3"].astype(jnp.float32) + kparams["b3"])
    logits = (h.astype(jnp.bfloat16).astype(jnp.float32)
              @ kparams["w4"].astype(jnp.float32) + kparams["b4"])[:, :NUM_CLASSES]
    return jax.nn.log_softmax(logits, axis=-1)


if __name__ == "__main__":
    key = jax.random.PRNGKey(0)
    pkey, xkey = jax.random.split(key)

    params = init_params(pkey)
    kparams = prepare_params(params)

    batch = 8
    x = jax.random.normal(xkey, (batch, IN_FEATURES), jnp.float32)

    out = net_forward(x, kparams)
    out = jax.block_until_ready(out)

    assert out.shape == (batch, NUM_CLASSES)

    out_f32 = out.astype(jnp.float32)

    # log_softmax rows should exp-sum to 1 (bf16 output -> relaxed tolerance)
    row_sums = jnp.sum(jnp.exp(out_f32), axis=-1)
    assert bool(jnp.all(jnp.abs(row_sums - 1.0) < 3e-2)), row_sums

    # match the pure-JAX reference (same bf16 weights)
    ref = _reference_forward(x, kparams)
    assert bool(jnp.all(jnp.abs(out_f32 - ref) < 5e-2)), \
        float(jnp.max(jnp.abs(out_f32 - ref)))

    print("KERNEL_OK")
</pallas_src>

<mosaic_0001>
module attributes {stable_mosaic.version = 11 : i64} {
  func.func @_mlp_kernel(%arg0: i32, %arg1: memref<8x784xf32, #tpu.memory_space<vmem>>, %arg2: memref<784x64xbf16, #tpu.memory_space<vmem>>, %arg3: memref<1x64xf32, #tpu.memory_space<vmem>>, %arg4: memref<64x64xbf16, #tpu.memory_space<vmem>>, %arg5: memref<1x64xf32, #tpu.memory_space<vmem>>, %arg6: memref<64x64xbf16, #tpu.memory_space<vmem>>, %arg7: memref<1x64xf32, #tpu.memory_space<vmem>>, %arg8: memref<64x128xbf16, #tpu.memory_space<vmem>>, %arg9: memref<1x128xf32, #tpu.memory_space<vmem>>, %arg10: memref<8x128xbf16, #tpu.memory_space<vmem>>) attributes {dimension_semantics = [#tpu.dimension_semantics<parallel>], iteration_bounds = array<i64: 1>, scalar_prefetch = 0 : i64, scratch_operands = 0 : i64, tpu.core_type = #tpu.core_type<tc>, window_params = [{transform_indices = @transform_0, window_bounds = array<i64: 8, 784>}, {pipeline_mode = #tpu.pipeline_mode<synchronous>, transform_indices = @transform_1, window_bounds = array<i64: 784, 64>}, {pipeline_mode = #tpu.pipeline_mode<synchronous>, transform_indices = @transform_2, window_bounds = array<i64: 1, 64>}, {pipeline_mode = #tpu.pipeline_mode<synchronous>, transform_indices = @transform_3, window_bounds = array<i64: 64, 64>}, {pipeline_mode = #tpu.pipeline_mode<synchronous>, transform_indices = @transform_4, window_bounds = array<i64: 1, 64>}, {pipeline_mode = #tpu.pipeline_mode<synchronous>, transform_indices = @transform_5, window_bounds = array<i64: 64, 64>}, {pipeline_mode = #tpu.pipeline_mode<synchronous>, transform_indices = @transform_6, window_bounds = array<i64: 1, 64>}, {pipeline_mode = #tpu.pipeline_mode<synchronous>, transform_indices = @transform_7, window_bounds = array<i64: 64, 128>}, {pipeline_mode = #tpu.pipeline_mode<synchronous>, transform_indices = @transform_8, window_bounds = array<i64: 1, 128>}, {transform_indices = @transform_9, window_bounds = array<i64: 8, 128>}]} {
    %c0 = arith.constant 0 : index
    %c0_0 = arith.constant 0 : index
    %0 = vector.load %arg1[%c0, %c0_0] : memref<8x784xf32, #tpu.memory_space<vmem>>, vector<8x784xf32>
    %1 = arith.truncf %0 : vector<8x784xf32> to vector<8x784xbf16>
    %c0_1 = arith.constant 0 : index
    %c0_2 = arith.constant 0 : index
    %2 = vector.load %arg2[%c0_1, %c0_2] : memref<784x64xbf16, #tpu.memory_space<vmem>>, vector<784x64xbf16>
    %cst = arith.constant dense<0.000000e+00> : vector<8x64xf32>
    %3 = tpu.matmul %1, %2, %cst {dimension_numbers = #tpu.dot_dimension_numbers<[1], [0], [0], [1], [0, 0, 1, 1], [], []>} : vector<8x784xbf16>, vector<784x64xbf16>, vector<8x64xf32> -> vector<8x64xf32>
    %c0_3 = arith.constant 0 : index
    %c0_4 = arith.constant 0 : index
    %4 = vector.load %arg3[%c0_3, %c0_4] : memref<1x64xf32, #tpu.memory_space<vmem>>, vector<1x64xf32>
    %5 = vector.broadcast %4 : vector<1x64xf32> to vector<8x64xf32>
    %6 = arith.addf %3, %5 : vector<8x64xf32>
    %cst_5 = arith.constant 0.000000e+00 : f32
    %7 = vector.broadcast %cst_5 : f32 to vector<8x64xf32>
    %8 = arith.maximumf %6, %7 : vector<8x64xf32>
    %9 = arith.truncf %8 : vector<8x64xf32> to vector<8x64xbf16>
    %c0_6 = arith.constant 0 : index
    %c0_7 = arith.constant 0 : index
    %10 = vector.load %arg4[%c0_6, %c0_7] : memref<64x64xbf16, #tpu.memory_space<vmem>>, vector<64x64xbf16>
    %cst_8 = arith.constant dense<0.000000e+00> : vector<8x64xf32>
    %11 = tpu.matmul %9, %10, %cst_8 {dimension_numbers = #tpu.dot_dimension_numbers<[1], [0], [0], [1], [0, 0, 1, 1], [], []>} : vector<8x64xbf16>, vector<64x64xbf16>, vector<8x64xf32> -> vector<8x64xf32>
    %c0_9 = arith.constant 0 : index
    %c0_10 = arith.constant 0 : index
    %12 = vector.load %arg5[%c0_9, %c0_10] : memref<1x64xf32, #tpu.memory_space<vmem>>, vector<1x64xf32>
    %13 = vector.broadcast %12 : vector<1x64xf32> to vector<8x64xf32>
    %14 = arith.addf %11, %13 : vector<8x64xf32>
    %cst_11 = arith.constant 0.000000e+00 : f32
    %15 = vector.broadcast %cst_11 : f32 to vector<8x64xf32>
    %16 = arith.maximumf %14, %15 : vector<8x64xf32>
    %17 = arith.truncf %16 : vector<8x64xf32> to vector<8x64xbf16>
    %c0_12 = arith.constant 0 : index
    %c0_13 = arith.constant 0 : index
    %18 = vector.load %arg6[%c0_12, %c0_13] : memref<64x64xbf16, #tpu.memory_space<vmem>>, vector<64x64xbf16>
    %cst_14 = arith.constant dense<0.000000e+00> : vector<8x64xf32>
    %19 = tpu.matmul %17, %18, %cst_14 {dimension_numbers = #tpu.dot_dimension_numbers<[1], [0], [0], [1], [0, 0, 1, 1], [], []>} : vector<8x64xbf16>, vector<64x64xbf16>, vector<8x64xf32> -> vector<8x64xf32>
    %c0_15 = arith.constant 0 : index
    %c0_16 = arith.constant 0 : index
    %20 = vector.load %arg7[%c0_15, %c0_16] : memref<1x64xf32, #tpu.memory_space<vmem>>, vector<1x64xf32>
    %21 = vector.broadcast %20 : vector<1x64xf32> to vector<8x64xf32>
    %22 = arith.addf %19, %21 : vector<8x64xf32>
    %cst_17 = arith.constant 0.000000e+00 : f32
    %23 = vector.broadcast %cst_17 : f32 to vector<8x64xf32>
    %24 = arith.maximumf %22, %23 : vector<8x64xf32>
    %25 = arith.truncf %24 : vector<8x64xf32> to vector<8x64xbf16>
    %c0_18 = arith.constant 0 : index
    %c0_19 = arith.constant 0 : index
    %26 = vector.load %arg8[%c0_18, %c0_19] : memref<64x128xbf16, #tpu.memory_space<vmem>>, vector<64x128xbf16>
    %cst_20 = arith.constant dense<0.000000e+00> : vector<8x128xf32>
    %27 = tpu.matmul %25, %26, %cst_20 {dimension_numbers = #tpu.dot_dimension_numbers<[1], [0], [0], [1], [0, 0, 1, 1], [], []>} : vector<8x64xbf16>, vector<64x128xbf16>, vector<8x128xf32> -> vector<8x128xf32>
    %c0_21 = arith.constant 0 : index
    %c0_22 = arith.constant 0 : index
    %28 = vector.load %arg9[%c0_21, %c0_22] : memref<1x128xf32, #tpu.memory_space<vmem>>, vector<1x128xf32>
    %29 = vector.broadcast %28 : vector<1x128xf32> to vector<8x128xf32>
    %30 = arith.addf %27, %29 : vector<8x128xf32>
    %cst_23 = arith.constant dense<0xFF800000> : vector<8xf32>
    %31 = vector.multi_reduction <maximumf>, %30, %cst_23 [1] : vector<8x128xf32> to vector<8xf32>
    %32 = vector.shape_cast %31 : vector<8xf32> to vector<8x1xf32>
    %33 = vector.broadcast %32 : vector<8x1xf32> to vector<8x128xf32>
    %34 = arith.subf %30, %33 : vector<8x128xf32>
    %35 = math.exp %34 : vector<8x128xf32>
    %cst_24 = arith.constant dense<0.000000e+00> : vector<8xf32>
    %36 = vector.multi_reduction <add>, %35, %cst_24 [1] : vector<8x128xf32> to vector<8xf32>
    %37 = vector.shape_cast %36 : vector<8xf32> to vector<8x1xf32>
    %38 = math.log %37 : vector<8x1xf32>
    %39 = vector.broadcast %38 : vector<8x1xf32> to vector<8x128xf32>
    %40 = arith.subf %34, %39 : vector<8x128xf32>
    %41 = arith.truncf %40 : vector<8x128xf32> to vector<8x128xbf16>
    %c0_25 = arith.constant 0 : index
    %c0_26 = arith.constant 0 : index
    %42 = vector.load %arg10[%c0_25, %c0_26] : memref<8x128xbf16, #tpu.memory_space<vmem>>, vector<8x128xbf16>
    tpu.vector_store %arg10[%c0_25, %c0_26], %41 {strides = array<i32>} : memref<8x128xbf16, #tpu.memory_space<vmem>>, vector<8x128xbf16>,
    return
  }
  func.func @transform_0(%arg0: i32) -> (i32, i32) {
    %c0_i32 = arith.constant 0 : i32
    %c0_i32_0 = arith.constant 0 : i32
    return %arg0, %c0_i32 : i32, i32
  }
  func.func @transform_1(%arg0: i32) -> (i32, i32) {
    %c0_i32 = arith.constant 0 : i32
    %c0_i32_0 = arith.constant 0 : i32
    %c0_i32_1 = arith.constant 0 : i32
    return %c0_i32, %c0_i32_0 : i32, i32
  }
  func.func @transform_2(%arg0: i32) -> (i32, i32) {
    %c0_i32 = arith.constant 0 : i32
    %c0_i32_0 = arith.constant 0 : i32
    %c0_i32_1 = arith.constant 0 : i32
    return %c0_i32, %c0_i32_0 : i32, i32
  }
  func.func @transform_3(%arg0: i32) -> (i32, i32) {
    %c0_i32 = arith.constant 0 : i32
    %c0_i32_0 = arith.constant 0 : i32
    %c0_i32_1 = arith.constant 0 : i32
    return %c0_i32, %c0_i32_0 : i32, i32
  }
  func.func @transform_4(%arg0: i32) -> (i32, i32) {
    %c0_i32 = arith.constant 0 : i32
    %c0_i32_0 = arith.constant 0 : i32
    %c0_i32_1 = arith.constant 0 : i32
    return %c0_i32, %c0_i32_0 : i32, i32
  }
  func.func @transform_5(%arg0: i32) -> (i32, i32) {
    %c0_i32 = arith.constant 0 : i32
    %c0_i32_0 = arith.constant 0 : i32
    %c0_i32_1 = arith.constant 0 : i32
    return %c0_i32, %c0_i32_0 : i32, i32
  }
  func.func @transform_6(%arg0: i32) -> (i32, i32) {
    %c0_i32 = arith.constant 0 : i32
    %c0_i32_0 = arith.constant 0 : i32
    %c0_i32_1 = arith.constant 0 : i32
    return %c0_i32, %c0_i32_0 : i32, i32
  }
  func.func @transform_7(%arg0: i32) -> (i32, i32) {
    %c0_i32 = arith.constant 0 : i32
    %c0_i32_0 = arith.constant 0 : i32
    %c0_i32_1 = arith.constant 0 : i32
    return %c0_i32, %c0_i32_0 : i32, i32
  }
  func.func @transform_8(%arg0: i32) -> (i32, i32) {
    %c0_i32 = arith.constant 0 : i32
    %c0_i32_0 = arith.constant 0 : i32
    %c0_i32_1 = arith.constant 0 : i32
    return %c0_i32, %c0_i32_0 : i32, i32
  }
  func.func @transform_9(%arg0: i32) -> (i32, i32) {
    %c0_i32 = arith.constant 0 : i32
    %c0_i32_0 = arith.constant 0 : i32
    return %arg0, %c0_i32 : i32, i32
  }
}

</mosaic_0001>

<llo_original>
// kernel: tpu_custom_call.1
$region0: #{tpu_custom_call.1}
  #allocation0 [shape = 'u32[]', space=smem, size = 0x4, offset = 0x4, fixed_abs, tag = 'smem constant byte address 0x4 - core index']
  #allocation1 [shape = 'u32[72,128]{1,0:T(1,128)}', space=vmem, size = 0x9000, scoped, tag = 'internal scratch']
  %s0 = inlined_call_operand.vmem [shape: f32[8,784], index: 0, kind: input, shape index: {}]
  %s1 = inlined_call_operand.vmem [shape: bf16[784,64], index: 1, kind: input, shape index: {}]
  %s2 = inlined_call_operand.vmem [shape: f32[1,64], index: 2, kind: input, shape index: {}]
  %s3 = inlined_call_operand.vmem [shape: bf16[64,64], index: 3, kind: input, shape index: {}]
  %s4 = inlined_call_operand.vmem [shape: f32[1,64], index: 4, kind: input, shape index: {}]
  %s5 = inlined_call_operand.vmem [shape: bf16[64,64], index: 5, kind: input, shape index: {}]
  %s6 = inlined_call_operand.vmem [shape: f32[1,64], index: 6, kind: input, shape index: {}]
  %s7 = inlined_call_operand.vmem [shape: bf16[64,128], index: 7, kind: input, shape index: {}]
  %s8 = inlined_call_operand.vmem [shape: f32[1,128], index: 8, kind: input, shape index: {}]
  %s9 = inlined_call_operand.hbm [shape: bf16[8,128], index: 9, kind: output, shape index: {}]
  %s10 = sld [smem:[#allocation0]]
  $region46: #{tpu_custom_call.1} parent=0
    _
  %s12 = ssub.s32 1, %s10
  %s13 = scalar_select 0, %s12, %s10
  $region1: #{tpu_custom_call.1} parent=0
    #allocation2 [shape = 'u8[2048]{0}', space=vmem, size = 0x800, scoped, tag = 'output window, operand 0, single buffered']
    #allocation3 [shape = 's32[1]{0}', space=sflag, size = 0x4, scoped, tag = 'scoped memory for tpu_custom_call.1']
    %14 = vsyncpa [#allocation3], 0
    // Predicated region
    $region2: #{tpu_custom_call.1} parent=1 // pred_check
      _
    $region3: #{tpu_custom_call.1} parent=1 // pred_check_branch
      %16 = sbr.rel (0) target = $region5
    $region4: #{tpu_custom_call.1} parent=1 // pred_region
      _
    $region5: #{tpu_custom_call.1} parent=1 // pred_fallthru
      _
    // Predicated region
    $region6: #{tpu_custom_call.1} parent=1 // pred_check
      _
    $region7: #{tpu_custom_call.1} parent=1 // pred_check_branch
      %18 = sbr.rel (0) target = $region9
    $region8: #{tpu_custom_call.1} parent=1 // pred_region
      _
    $region9: #{tpu_custom_call.1} parent=1 // pred_fallthru
      _
    // Predicated region
    $region10: #{tpu_custom_call.1} parent=1 // pred_check
      _
    $region11: #{tpu_custom_call.1} parent=1 // pred_check_branch
      %20 = sbr.rel (0) target = $region13
    $region12: #{tpu_custom_call.1} parent=1 // pred_region
      _
    $region13: #{tpu_custom_call.1} parent=1 // pred_fallthru
      _
    // Predicated region
    $region14: #{tpu_custom_call.1} parent=1 // pred_check
      _
    $region15: #{tpu_custom_call.1} parent=1 // pred_check_branch
      %22 = sbr.rel (0) target = $region17
    $region16: #{tpu_custom_call.1} parent=1 // pred_region
      _
    $region17: #{tpu_custom_call.1} parent=1 // pred_fallthru
      _
    // Predicated region
    $region18: #{tpu_custom_call.1} parent=1 // pred_check
      _
    $region19: #{tpu_custom_call.1} parent=1 // pred_check_branch
      %24 = sbr.rel (0) target = $region21
    $region20: #{tpu_custom_call.1} parent=1 // pred_region
      _
    $region21: #{tpu_custom_call.1} parent=1 // pred_fallthru
      _
    // Predicated region
    $region22: #{tpu_custom_call.1} parent=1 // pred_check
      _
    $region23: #{tpu_custom_call.1} parent=1 // pred_check_branch
      %26 = sbr.rel (0) target = $region25
    $region24: #{tpu_custom_call.1} parent=1 // pred_region
      _
    $region25: #{tpu_custom_call.1} parent=1 // pred_fallthru
      _
    // Predicated region
    $region26: #{tpu_custom_call.1} parent=1 // pred_check
      _
    $region27: #{tpu_custom_call.1} parent=1 // pred_check_branch
      %28 = sbr.rel (0) target = $region29
    $region28: #{tpu_custom_call.1} parent=1 // pred_region
      _
    $region29: #{tpu_custom_call.1} parent=1 // pred_fallthru
      _
    // Predicated region
    $region30: #{tpu_custom_call.1} parent=1 // pred_check
      _
    $region31: #{tpu_custom_call.1} parent=1 // pred_check_branch
      %30 = sbr.rel (0) target = $region33
    $region32: #{tpu_custom_call.1} parent=1 // pred_region
      _
    $region33: #{tpu_custom_call.1} parent=1 // pred_fallthru
      _
    // Predicated region
    $region34: #{tpu_custom_call.1} parent=1 // pred_check
      _
    $region35: #{tpu_custom_call.1} parent=1 // pred_check_branch
      %32 = sbr.rel (0) target = $region37
    $region36: #{tpu_custom_call.1} parent=1 // pred_region
      _
    $region37: #{tpu_custom_call.1} parent=1 // pred_fallthru
      _
    %v34 = vld [vmem:[%s0] sm:$0xff]
    %v35 = vld [vmem:[%s0 + $0x8] sm:$0xff]
    %v36 = vld [vmem:[%s0 + $0x10] sm:$0xff]
    %v37 = vld [vmem:[%s0 + $0x18] sm:$0xff]
    %v38 = vld [vmem:[%s0 + $0x20] sm:$0xff]
    %v39 = vld [vmem:[%s0 + $0x28] sm:$0xff]
    %v40 = vld [vmem:[%s0 + $0x30] sm:$0xff]
    %v41 = vpack.c.bf16 %v34, %v34
    %v42 = vpack.c.bf16 %v35, %v35
    %v43 = vpack.c.bf16 %v36, %v36
    %v44 = vpack.c.bf16 %v37, %v37
    %v45 = vpack.c.bf16 %v38, %v38
    %v46 = vpack.c.bf16 %v39, %v39
    %v47 = vpack.c.bf16 %v40, %v40
    %v48 = vld [vmem:[%s1] sm:$0xf]
    %v49 = vld [vmem:[%s1 + $0x4] sm:$0xf]
    %v50 = vld [vmem:[%s1 + $0x8] sm:$0xf]
    %v51 = vld [vmem:[%s1 + $0xc] sm:$0xf]
    %v52 = vld [vmem:[%s1 + $0x10] sm:$0xf]
    %v53 = vld [vmem:[%s1 + $0x14] sm:$0xf]
    %v54 = vld [vmem:[%s1 + $0x18] sm:$0xf]
    %v55 = vld [vmem:[%s1 + $0x1c] sm:$0xf]
    %v56 = vld [vmem:[%s1 + $0x20] sm:$0xf]
    %v57 = vld [vmem:[%s1 + $0x24] sm:$0xf]
    %v58 = vld [vmem:[%s1 + $0x28] sm:$0xf]
    %v59 = vld [vmem:[%s1 + $0x2c] sm:$0xf]
    %v60 = vld [vmem:[%s1 + $0x30] sm:$0xf]
    %v61 = vld [vmem:[%s1 + $0x34] sm:$0xf]
    %v62 = vld [vmem:[%s1 + $0x38] sm:$0xf]
    %v63 = vld [vmem:[%s1 + $0x3c] sm:$0xf]
    %v64 = vld [vmem:[%s1 + $0x40] sm:$0xf]
    %v65 = vld [vmem:[%s1 + $0x44] sm:$0xf]
    %v66 = vld [vmem:[%s1 + $0x48] sm:$0xf]
    %v67 = vld [vmem:[%s1 + $0x4c] sm:$0xf]
    %v68 = vld [vmem:[%s1 + $0x50] sm:$0xf]
    %v69 = vld [vmem:[%s1 + $0x54] sm:$0xf]
    %v70 = vld [vmem:[%s1 + $0x58] sm:$0xf]
    %v71 = vld [vmem:[%s1 + $0x5c] sm:$0xf]
    %v72 = vld [vmem:[%s1 + $0x60] sm:$0xf]
    %v73 = vld [vmem:[%s1 + $0x64] sm:$0xf]
    %v74 = vld [vmem:[%s1 + $0x68] sm:$0xf]
    %v75 = vld [vmem:[%s1 + $0x6c] sm:$0xf]
    %v76 = vld [vmem:[%s1 + $0x70] sm:$0xf]
    %v77 = vld [vmem:[%s1 + $0x74] sm:$0xf]
    %v78 = vld [vmem:[%s1 + $0x78] sm:$0xf]
    %v79 = vld [vmem:[%s1 + $0x7c] sm:$0xf]
    %v80 = vld [vmem:[%s1 + $0x80] sm:$0xf]
    %v81 = vld [vmem:[%s1 + $0x84] sm:$0xf]
    %v82 = vld [vmem:[%s1 + $0x88] sm:$0xf]
    %v83 = vld [vmem:[%s1 + $0x8c] sm:$0xf]
    %v84 = vld [vmem:[%s1 + $0x90] sm:$0xf]
    %v85 = vld [vmem:[%s1 + $0x94] sm:$0xf]
    %v86 = vld [vmem:[%s1 + $0x98] sm:$0xf]
    %v87 = vld [vmem:[%s1 + $0x9c] sm:$0xf]
    %v88 = vld [vmem:[%s1 + $0xa0] sm:$0xf]
    %v89 = vld [vmem:[%s1 + $0xa4] sm:$0xf]
    %v90 = vld [vmem:[%s1 + $0xa8] sm:$0xf]
    %v91 = vld [vmem:[%s1 + $0xac] sm:$0xf]
    %v92 = vld [vmem:[%s1 + $0xb0] sm:$0xf]
    %v93 = vld [vmem:[%s1 + $0xb4] sm:$0xf]
    %v94 = vld [vmem:[%s1 + $0xb8] sm:$0xf]
    %v95 = vld [vmem:[%s1 + $0xbc] sm:$0xf]
    %v96 = vld [vmem:[%s1 + $0xc0] sm:$0xf]
    %v97 = vld [vmem:[%s1 + $0xc4] sm:$0xf]
    %v98 = vld [vmem:[%s1 + $0xc8] sm:$0xf]
    %v99 = vld [vmem:[%s1 + $0xcc] sm:$0xf]
    %v100 = vld [vmem:[%s1 + $0xd0] sm:$0xf]
    %v101 = vld [vmem:[%s1 + $0xd4] sm:$0xf]
    %v102 = vld [vmem:[%s1 + $0xd8] sm:$0xf]
    %v103 = vld [vmem:[%s1 + $0xdc] sm:$0xf]
    %v104 = vld [vmem:[%s1 + $0xe0] sm:$0xf]
    %v105 = vld [vmem:[%s1 + $0xe4] sm:$0xf]
    %v106 = vld [vmem:[%s1 + $0xe8] sm:$0xf]
    %v107 = vld [vmem:[%s1 + $0xec] sm:$0xf]
    %v108 = vld [vmem:[%s1 + $0xf0] sm:$0xf]
    %v109 = vld [vmem:[%s1 + $0xf4] sm:$0xf]
    %v110 = vld [vmem:[%s1 + $0xf8] sm:$0xf]
    %v111 = vld [vmem:[%s1 + $0xfc] sm:$0xf]
    %v112 = vld [vmem:[%s1 + $0x100] sm:$0xf]
    %v113 = vld [vmem:[%s1 + $0x104] sm:$0xf]
    %v114 = vld [vmem:[%s1 + $0x108] sm:$0xf]
    %v115 = vld [vmem:[%s1 + $0x10c] sm:$0xf]
    %v116 = vld [vmem:[%s1 + $0x110] sm:$0xf]
    %v117 = vld [vmem:[%s1 + $0x114] sm:$0xf]
    %v118 = vld [vmem:[%s1 + $0x118] sm:$0xf]
    %v119 = vld [vmem:[%s1 + $0x11c] sm:$0xf]
    %v120 = vld [vmem:[%s1 + $0x120] sm:$0xf]
    %v121 = vld [vmem:[%s1 + $0x124] sm:$0xf]
    %v122 = vld [vmem:[%s1 + $0x128] sm:$0xf]
    %v123 = vld [vmem:[%s1 + $0x12c] sm:$0xf]
    %v124 = vld [vmem:[%s1 + $0x130] sm:$0xf]
    %v125 = vld [vmem:[%s1 + $0x134] sm:$0xf]
    %v126 = vld [vmem:[%s1 + $0x138] sm:$0xf]
    %v127 = vld [vmem:[%s1 + $0x13c] sm:$0xf]
    %v128 = vld [vmem:[%s1 + $0x140] sm:$0xf]
    %v129 = vld [vmem:[%s1 + $0x144] sm:$0xf]
    %v130 = vld [vmem:[%s1 + $0x148] sm:$0xf]
    %v131 = vld [vmem:[%s1 + $0x14c] sm:$0xf]
    %v132 = vld [vmem:[%s1 + $0x150] sm:$0xf]
    %v133 = vld [vmem:[%s1 + $0x154] sm:$0xf]
    %v134 = vld [vmem:[%s1 + $0x158] sm:$0xf]
    %v135 = vld [vmem:[%s1 + $0x15c] sm:$0xf]
    %v136 = vld [vmem:[%s1 + $0x160] sm:$0xf]
    %v137 = vld [vmem:[%s1 + $0x164] sm:$0xf]
    %v138 = vld [vmem:[%s1 + $0x168] sm:$0xf]
    %v139 = vld [vmem:[%s1 + $0x16c] sm:$0xf]
    %v140 = vld [vmem:[%s1 + $0x170] sm:$0xf]
    %v141 = vld [vmem:[%s1 + $0x174] sm:$0xf]
    %v142 = vld [vmem:[%s1 + $0x178] sm:$0xf]
    %v143 = vld [vmem:[%s1 + $0x17c] sm:$0xf]
    %v144 = vld [vmem:[%s1 + $0x180] sm:$0xf]
    %v145 = vld [vmem:[%s1 + $0x184] sm:$0xf]
    %v146 = vld [vmem:[%s2] sm:$0x1]
    %v148 = vperm.slane %v146, 0
    %v248 = vunpack.c.l.b16 %v48
    %v249 = vunpack.c.l.b16 %v49
    %v250 = vunpack.c.l.b16 %v50
    %v251 = vunpack.c.l.b16 %v51
    %v252 = vunpack.c.l.b16 %v52
    %v253 = vunpack.c.l.b16 %v53
    %v254 = vunpack.c.l.b16 %v54
    %v255 = vunpack.c.l.b16 %v55
    %v256 = vunpack.c.l.b16 %v56
    %v257 = vunpack.c.l.b16 %v57
    %v258 = vunpack.c.l.b16 %v58
    %v259 = vunpack.c.l.b16 %v59
    %v260 = vunpack.c.l.b16 %v60
    %v261 = vunpack.c.l.b16 %v61
    %v262 = vunpack.c.l.b16 %v62
    %v263 = vunpack.c.l.b16 %v63
    %v264 = vunpack.c.l.b16 %v64
    %v265 = vunpack.c.l.b16 %v65
    %v266 = vunpack.c.l.b16 %v66
    %v267 = vunpack.c.l.b16 %v67
    %v268 = vunpack.c.l.b16 %v68
    %v269 = vunpack.c.l.b16 %v69
    %v270 = vunpack.c.l.b16 %v70
    %v271 = vunpack.c.l.b16 %v71
    %v272 = vunpack.c.l.b16 %v72
    %v273 = vunpack.c.l.b16 %v73
    %v274 = vunpack.c.l.b16 %v74
    %v275 = vunpack.c.l.b16 %v75
    %v276 = vunpack.c.l.b16 %v76
    %v277 = vunpack.c.l.b16 %v77
    %v278 = vunpack.c.l.b16 %v78
    %v279 = vunpack.c.l.b16 %v79
    %v280 = vunpack.c.l.b16 %v80
    %v281 = vunpack.c.l.b16 %v81
    %v282 = vunpack.c.l.b16 %v82
    %v283 = vunpack.c.l.b16 %v83
    %v284 = vunpack.c.l.b16 %v84
    %v285 = vunpack.c.l.b16 %v85
    %v286 = vunpack.c.l.b16 %v86
    %v287 = vunpack.c.l.b16 %v87
    %v288 = vunpack.c.l.b16 %v88
    %v289 = vunpack.c.l.b16 %v89
    %v290 = vunpack.c.l.b16 %v90
    %v291 = vunpack.c.l.b16 %v91
    %v292 = vunpack.c.l.b16 %v92
    %v293 = vunpack.c.l.b16 %v93
    %v294 = vunpack.c.l.b16 %v94
    %v295 = vunpack.c.l.b16 %v95
    %v296 = vunpack.c.l.b16 %v96
    %v297 = vunpack.c.l.b16 %v97
    %v298 = vunpack.c.l.b16 %v98
    %v299 = vunpack.c.l.b16 %v99
    %v300 = vunpack.c.l.b16 %v100
    %v301 = vunpack.c.l.b16 %v101
    %v302 = vunpack.c.l.b16 %v102
    %v303 = vunpack.c.l.b16 %v103
    %v304 = vunpack.c.l.b16 %v104
    %v305 = vunpack.c.l.b16 %v105
    %v306 = vunpack.c.l.b16 %v106
    %v307 = vunpack.c.l.b16 %v107
    %v308 = vunpack.c.l.b16 %v108
    %v309 = vunpack.c.l.b16 %v109
    %v310 = vunpack.c.l.b16 %v110
    %v311 = vunpack.c.l.b16 %v111
    %v312 = vunpack.c.l.b16 %v112
    %v313 = vunpack.c.l.b16 %v113
    %v314 = vunpack.c.l.b16 %v114
    %v315 = vunpack.c.l.b16 %v115
    %v316 = vunpack.c.l.b16 %v116
    %v317 = vunpack.c.l.b16 %v117
    %v318 = vunpack.c.l.b16 %v118
    %v319 = vunpack.c.l.b16 %v119
    %v320 = vunpack.c.l.b16 %v120
    %v321 = vunpack.c.l.b16 %v121
    %v322 = vunpack.c.l.b16 %v122
    %v323 = vunpack.c.l.b16 %v123
    %v324 = vunpack.c.l.b16 %v124
    %v325 = vunpack.c.l.b16 %v125
    %v326 = vunpack.c.l.b16 %v126
    %v327 = vunpack.c.l.b16 %v127
    %v328 = vunpack.c.l.b16 %v128
    %v329 = vunpack.c.l.b16 %v129
    %v330 = vunpack.c.l.b16 %v130
    %v331 = vunpack.c.l.b16 %v131
    %v332 = vunpack.c.l.b16 %v132
    %v333 = vunpack.c.l.b16 %v133
    %v334 = vunpack.c.l.b16 %v134
    %v335 = vunpack.c.l.b16 %v135
    %v336 = vunpack.c.l.b16 %v136
    %v337 = vunpack.c.l.b16 %v137
    %v338 = vunpack.c.l.b16 %v138
    %v339 = vunpack.c.l.b16 %v139
    %v340 = vunpack.c.l.b16 %v140
    %v341 = vunpack.c.l.b16 %v141
    %v342 = vunpack.c.l.b16 %v142
    %v343 = vunpack.c.l.b16 %v143
    %v344 = vunpack.c.l.b16 %v144
    %v345 = vunpack.c.l.b16 %v145
    %v346 = vpack.c.b16 %v249, %v248
    %v347 = vpack.c.b16 %v251, %v250
    %v348 = vpack.c.b16 %v253, %v252
    %v349 = vpack.c.b16 %v255, %v254
    %v350 = vpack.c.b16 %v257, %v256
    %v351 = vpack.c.b16 %v259, %v258
    %v352 = vpack.c.b16 %v261, %v260
    %v353 = vpack.c.b16 %v263, %v262
    %v354 = vpack.c.b16 %v265, %v264
    %v355 = vpack.c.b16 %v267, %v266
    %v356 = vpack.c.b16 %v269, %v268
    %v357 = vpack.c.b16 %v271, %v270
    %v358 = vpack.c.b16 %v273, %v272
    %v359 = vpack.c.b16 %v275, %v274
    %v360 = vpack.c.b16 %v277, %v276
    %v361 = vpack.c.b16 %v279, %v278
    %v362 = vpack.c.b16 %v281, %v280
    %v363 = vpack.c.b16 %v283, %v282
    %v364 = vpack.c.b16 %v285, %v284
    %v365 = vpack.c.b16 %v287, %v286
    %v366 = vpack.c.b16 %v289, %v288
    %v367 = vpack.c.b16 %v291, %v290
    %v368 = vpack.c.b16 %v293, %v292
    %v369 = vpack.c.b16 %v295, %v294
    %v370 = vpack.c.b16 %v297, %v296
    %v371 = vpack.c.b16 %v299, %v298
    %v372 = vpack.c.b16 %v301, %v300
    %v373 = vpack.c.b16 %v303, %v302
    %v374 = vpack.c.b16 %v305, %v304
    %v375 = vpack.c.b16 %v307, %v306
    %v376 = vpack.c.b16 %v309, %v308
    %v377 = vpack.c.b16 %v311, %v310
    %v378 = vpack.c.b16 %v313, %v312
    %v379 = vpack.c.b16 %v315, %v314
    %v380 = vpack.c.b16 %v317, %v316
    %v381 = vpack.c.b16 %v319, %v318
    %v382 = vpack.c.b16 %v321, %v320
    %v383 = vpack.c.b16 %v323, %v322
    %v384 = vpack.c.b16 %v325, %v324
    %v385 = vpack.c.b16 %v327, %v326
    %v386 = vpack.c.b16 %v329, %v328
    %v387 = vpack.c.b16 %v331, %v330
    %v388 = vpack.c.b16 %v333, %v332
    %v389 = vpack.c.b16 %v335, %v334
    %v390 = vpack.c.b16 %v337, %v336
    %v391 = vpack.c.b16 %v339, %v338
    %v392 = vpack.c.b16 %v341, %v340
    %v393 = vpack.c.b16 %v343, %v342
    %v394 = vpack.c.b16 %v345, %v344
    %vm444 = vcmask 130048
    %v446 = vsel %vm444, %v47, 0
    %448 = vmatpush.bf16.msra.mxu0 %v353
    %449 = vmatpush.bf16.msra.mxu0 %v352
    %450 = vmatpush.bf16.msra.mxu0 %v351
    %451 = vmatpush.bf16.msra.mxu0 %v350
    %452 = vmatpush.bf16.msra.mxu0 %v349
    %453 = vmatpush.bf16.msra.mxu0 %v348
    %454 = vmatpush.bf16.msra.mxu0 %v347
    %455 = vmatpush.bf16.msra.mxu0 %v346
    %456 = vmatmul.bf16.gmra.mxu0 %v41
    %v457 = vpop.f32.mrf.mxu0
    %v458 = vadd.f32 %v148, %v457
    %v459 = vpop.f32.mrf.mxu0
    %460 = vdwg.mxu0
    %461 = vmatpush.bf16.msra.mxu0 %v361
    %462 = vmatpush.bf16.msra.mxu0 %v360
    %463 = vmatpush.bf16.msra.mxu0 %v359
    %464 = vmatpush.bf16.msra.mxu0 %v358
    %465 = vmatpush.bf16.msra.mxu0 %v357
    %466 = vmatpush.bf16.msra.mxu0 %v356
    %467 = vmatpush.bf16.msra.mxu0 %v355
    %468 = vmatpush.bf16.msra.mxu0 %v354
    %469 = vmatmul.bf16.gmra.mxu0 %v42
    %v470 = vpop.f32.mrf.mxu0
    %v471 = vadd.f32 %v458, %v470
    %v472 = vpop.f32.mrf.mxu0
    %473 = vdwg.mxu0
    %474 = vmatpush.bf16.msra.mxu0 %v369
    %475 = vmatpush.bf16.msra.mxu0 %v368
    %476 = vmatpush.bf16.msra.mxu0 %v367
    %477 = vmatpush.bf16.msra.mxu0 %v366
    %478 = vmatpush.bf16.msra.mxu0 %v365
    %479 = vmatpush.bf16.msra.mxu0 %v364
    %480 = vmatpush.bf16.msra.mxu0 %v363
    %481 = vmatpush.bf16.msra.mxu0 %v362
    %482 = vmatmul.bf16.gmra.mxu0 %v43
    %v483 = vpop.f32.mrf.mxu0
    %v484 = vadd.f32 %v471, %v483
    %v485 = vpop.f32.mrf.mxu0
    %486 = vdwg.mxu0
    %487 = vmatpush.bf16.msra.mxu0 %v377
    %488 = vmatpush.bf16.msra.mxu0 %v376
    %489 = vmatpush.bf16.msra.mxu0 %v375
    %490 = vmatpush.bf16.msra.mxu0 %v374
    %491 = vmatpush.bf16.msra.mxu0 %v373
    %492 = vmatpush.bf16.msra.mxu0 %v372
    %493 = vmatpush.bf16.msra.mxu0 %v371
    %494 = vmatpush.bf16.msra.mxu0 %v370
    %495 = vmatmul.bf16.gmra.mxu0 %v44
    %v496 = vpop.f32.mrf.mxu0
    %v497 = vadd.f32 %v484, %v496
    %v498 = vpop.f32.mrf.mxu0
    %499 = vdwg.mxu0
    %500 = vmatpush.bf16.msra.mxu0 %v385
    %501 = vmatpush.bf16.msra.mxu0 %v384
    %502 = vmatpush.bf16.msra.mxu0 %v383
    %503 = vmatpush.bf16.msra.mxu0 %v382
    %504 = vmatpush.bf16.msra.mxu0 %v381
    %505 = vmatpush.bf16.msra.mxu0 %v380
    %506 = vmatpush.bf16.msra.mxu0 %v379
    %507 = vmatpush.bf16.msra.mxu0 %v378
    %508 = vmatmul.bf16.gmra.mxu0 %v45
    %v509 = vpop.f32.mrf.mxu0
    %v510 = vadd.f32 %v497, %v509
    %v511 = vpop.f32.mrf.mxu0
    %512 = vdwg.mxu0
    %513 = vmatpush.bf16.msra.mxu0 %v393
    %514 = vmatpush.bf16.msra.mxu0 %v392
    %515 = vmatpush.bf16.msra.mxu0 %v391
    %516 = vmatpush.bf16.msra.mxu0 %v390
    %517 = vmatpush.bf16.msra.mxu0 %v389
    %518 = vmatpush.bf16.msra.mxu0 %v388
    %519 = vmatpush.bf16.msra.mxu0 %v387
    %520 = vmatpush.bf16.msra.mxu0 %v386
    %521 = vmatmul.bf16.gmra.mxu0 %v46
    %v522 = vpop.f32.mrf.mxu0
    %v523 = vadd.f32 %v510, %v522
    %v524 = vpop.f32.mrf.mxu0
    %525 = vdwg.mxu0
    %526 = vmatpush.bf16.msra.mxu0 0
    %527 = vmatpush.bf16.msra.mxu0 0
    %528 = vmatpush.bf16.msra.mxu0 0
    %529 = vmatpush.bf16.msra.mxu0 0
    %530 = vmatpush.bf16.msra.mxu0 0
    %531 = vmatpush.bf16.msra.mxu0 0
    %532 = vmatpush.bf16.msra.mxu0 0
    %533 = vmatpush.bf16.msra.mxu0 %v394
    %534 = vmatmul.bf16.gmra.mxu0 %v446
    %v535 = vpop.f32.mrf.mxu0
    %v536 = vadd.f32 %v523, %v535
    %v537 = vpop.f32.mrf.mxu0
    %538 = vdwg.mxu0
    %v539 = vmax.f32 %v536, 0.0
    %v540 = vpack.c.bf16 %v539, %v539
    %v541 = vld [vmem:[%s3] sm:$0xf]
    %v542 = vld [vmem:[%s3 + $0x4] sm:$0xf]
    %v543 = vld [vmem:[%s3 + $0x8] sm:$0xf]
    %v544 = vld [vmem:[%s3 + $0xc] sm:$0xf]
    %v545 = vld [vmem:[%s3 + $0x10] sm:$0xf]
    %v546 = vld [vmem:[%s3 + $0x14] sm:$0xf]
    %v547 = vld [vmem:[%s3 + $0x18] sm:$0xf]
    %v548 = vld [vmem:[%s3 + $0x1c] sm:$0xf]
    %v549 = vld [vmem:[%s4] sm:$0x1]
    %v551 = vperm.slane %v549, 0
    %v561 = vunpack.c.l.b16 %v541
    %v562 = vunpack.c.l.b16 %v542
    %v563 = vunpack.c.l.b16 %v543
    %v564 = vunpack.c.l.b16 %v544
    %v565 = vunpack.c.l.b16 %v545
    %v566 = vunpack.c.l.b16 %v546
    %v567 = vunpack.c.l.b16 %v547
    %v568 = vunpack.c.l.b16 %v548
    %v569 = vpack.c.b16 %v562, %v561
    %v570 = vpack.c.b16 %v564, %v563
    %v571 = vpack.c.b16 %v566, %v565
    %v572 = vpack.c.b16 %v568, %v567
    %vm577 = vcmask 523264
    %v579 = vsel %vm577, %v540, 0
    %581 = vmatpush.bf16.msra.mxu0 0
    %582 = vmatpush.bf16.msra.mxu0 0
    %583 = vmatpush.bf16.msra.mxu0 0
    %584 = vmatpush.bf16.msra.mxu0 0
    %585 = vmatpush.bf16.msra.mxu0 %v572
    %586 = vmatpush.bf16.msra.mxu0 %v571
    %587 = vmatpush.bf16.msra.mxu0 %v570
    %588 = vmatpush.bf16.msra.mxu0 %v569
    %589 = vmatmul.bf16.gmra.mxu0 %v579
    %v590 = vpop.f32.mrf.mxu0
    %v591 = vadd.f32 %v551, %v590
    %v592 = vpop.f32.mrf.mxu0
    %593 = vdwg.mxu0
    %v594 = vmax.f32 %v591, 0.0
    %v595 = vpack.c.bf16 %v594, %v594
    %v596 = vld [vmem:[%s5] sm:$0xf]
    %v597 = vld [vmem:[%s5 + $0x4] sm:$0xf]
    %v598 = vld [vmem:[%s5 + $0x8] sm:$0xf]
    %v599 = vld [vmem:[%s5 + $0xc] sm:$0xf]
    %v600 = vld [vmem:[%s5 + $0x10] sm:$0xf]
    %v601 = vld [vmem:[%s5 + $0x14] sm:$0xf]
    %v602 = vld [vmem:[%s5 + $0x18] sm:$0xf]
    %v603 = vld [vmem:[%s5 + $0x1c] sm:$0xf]
    %v604 = vld [vmem:[%s6] sm:$0x1]
    %v606 = vperm.slane %v604, 0
    %v616 = vunpack.c.l.b16 %v596
    %v617 = vunpack.c.l.b16 %v597
    %v618 = vunpack.c.l.b16 %v598
    %v619 = vunpack.c.l.b16 %v599
    %v620 = vunpack.c.l.b16 %v600
    %v621 = vunpack.c.l.b16 %v601
    %v622 = vunpack.c.l.b16 %v602
    %v623 = vunpack.c.l.b16 %v603
    %v624 = vpack.c.b16 %v617, %v616
    %v625 = vpack.c.b16 %v619, %v618
    %v626 = vpack.c.b16 %v621, %v620
    %v627 = vpack.c.b16 %v623, %v622
    %v633 = vsel %vm577, %v595, 0
    %635 = vmatpush.bf16.msra.mxu0 0
    %636 = vmatpush.bf16.msra.mxu0 0
    %637 = vmatpush.bf16.msra.mxu0 0
    %638 = vmatpush.bf16.msra.mxu0 0
    %639 = vmatpush.bf16.msra.mxu0 %v627
    %640 = vmatpush.bf16.msra.mxu0 %v626
    %641 = vmatpush.bf16.msra.mxu0 %v625
    %642 = vmatpush.bf16.msra.mxu0 %v624
    %643 = vmatmul.bf16.gmra.mxu0 %v633
    %v644 = vpop.f32.mrf.mxu0
    %v645 = vadd.f32 %v606, %v644
    %v646 = vpop.f32.mrf.mxu0
    %647 = vdwg.mxu0
    %v648 = vmax.f32 %v645, 0.0
    %v649 = vpack.c.bf16 %v648, %v648
    %v650 = vld [vmem:[%s7] sm:$0xf]
    %v651 = vld [vmem:[%s7 + $0x4] sm:$0xf]
    %v652 = vld [vmem:[%s7 + $0x8] sm:$0xf]
    %v653 = vld [vmem:[%s7 + $0xc] sm:$0xf]
    %v654 = vld [vmem:[%s7 + $0x10] sm:$0xf]
    %v655 = vld [vmem:[%s7 + $0x14] sm:$0xf]
    %v656 = vld [vmem:[%s7 + $0x18] sm:$0xf]
    %v657 = vld [vmem:[%s7 + $0x1c] sm:$0xf]
    %v658 = vld [vmem:[%s8] sm:$0x1]
    %v660 = vperm.slane %v658, 0
    %v670 = vunpack.c.l.b16 %v650
    %v671 = vunpack.c.l.b16 %v651
    %v672 = vunpack.c.l.b16 %v652
    %v673 = vunpack.c.l.b16 %v653
    %v674 = vunpack.c.l.b16 %v654
    %v675 = vunpack.c.l.b16 %v655
    %v676 = vunpack.c.l.b16 %v656
    %v677 = vunpack.c.l.b16 %v657
    %v678 = vpack.c.b16 %v671, %v670
    %v679 = vpack.c.b16 %v673, %v672
    %v680 = vpack.c.b16 %v675, %v674
    %v681 = vpack.c.b16 %v677, %v676
    %v687 = vsel %vm577, %v649, 0
    %689 = vmatpush.bf16.msra.mxu0 0
    %690 = vmatpush.bf16.msra.mxu0 0
    %691 = vmatpush.bf16.msra.mxu0 0
    %692 = vmatpush.bf16.msra.mxu0 0
    %693 = vmatpush.bf16.msra.mxu0 %v681
    %694 = vmatpush.bf16.msra.mxu0 %v680
    %695 = vmatpush.bf16.msra.mxu0 %v679
    %696 = vmatpush.bf16.msra.mxu0 %v678
    %697 = vmatmul.bf16.gmra.mxu0 %v687
    %v698 = vpop.f32.mrf.mxu0
    %v699 = vadd.f32 %v660, %v698
    %v700 = vpop.f32.mrf.mxu0
    %701 = vdwg.mxu0
    %702 = vmax.xlane.f32.xlu0 %v699
    %v703 = vpop.xlane.xlu0 %702
    %v704 = vsub.f32 %v699, %v703
    %v705 = vmul.f32 %v704, 1.442695
    %v706 = vpow.pop %v705
    %707 = vadd.xlane.f32.xlu0 %v706
    %v708 = vpop.xlane.xlu0 %707
    %v709 = vlog2.pop %v708
    %v710 = vmul.f32 %v709, 0.6931472
    %v711 = vsub.f32 %v704, %v710
    %v712 = vpack.c.bf16 %v711, %v711
    %713 = vst [vmem:[#allocation2] sm:$0xf] %v712
    // Predicated region
    $region38: #{tpu_custom_call.1} parent=1 // pred_check
      _
    $region39: #{tpu_custom_call.1} parent=1 // pred_check_branch
      %715 = sbr.rel (0) target = $region41
    $region40: #{tpu_custom_call.1} parent=1 // pred_region
      %717 = vsyncadd [#allocation3], 0
      %s719 = sshll.u32 [#allocation2], 4
      %s720 = int_to_ptr.vmem [resolvable:$true] %s719
      %s721 = sshll.u32 %s9, 4
      %s722 = int_to_ptr.hbm [resolvable:$true] %s721
      %724 = dma.vmem_to_hbm [thread:$0]  %s720, 64, %s722, [#allocation3]
    $region41: #{tpu_custom_call.1} parent=1 // pred_fallthru
      _
    // Predicated region
    $region42: #{tpu_custom_call.1} parent=1 // pred_check
      _
    $region43: #{tpu_custom_call.1} parent=1 // pred_check_branch
      %726 = sbr.rel (0) target = $region45
    $region44: #{tpu_custom_call.1} parent=1 // pred_region
      %728 = dma.done [#allocation3], 64
    $region45: #{tpu_custom_call.1} parent=1 // pred_fallthru
      _
    %729 = vsyncpa [#allocation3], 1

</llo_original>
